<compile_context>
chip_gen: v5e
topology: v5e:2x2
jax: 0.10.0
libtpu: 0.0.40
codegen_flags: <defaults>
</compile_context>

<pallas_src>
import functools

import jax
import jax.numpy as jnp
from jax.experimental import pallas as pl
from jax.experimental.pallas import tpu as pltpu

_EPS = 1e-5   # PyTorch LayerNorm / GroupNorm default eps
_NEG = -1e30  # stand-in for float('-inf') in masked softmax

# packed (1, D) parameter-vector row indices for the fused head kernel
(_V_BL1, _V_BL2, _V_BL3, _V_BC, _V_GC, _V_BEC,
 _V_FB1, _V_FG1, _V_FBE1, _V_FB2, _V_FG2, _V_FBE2,
 _V_BQ, _V_BK, _V_BV, _V_BO, _V_GD, _V_BD,
 _V_BB1, _V_BB2, _V_GNG, _V_GNB) = range(22)

# stacked (D, D) weight-matrix indices for the fused head kernel
(_M_WL1, _M_WL2, _M_WL3, _M_WC,
 _M_FW1A, _M_FW1B, _M_FW2,
 _M_WQ, _M_WK, _M_WV, _M_WO,
 _M_BW1, _M_BW2) = range(13)


def _ln(x, g, b):
    mu = jnp.mean(x, axis=-1, keepdims=True)
    var = jnp.mean((x - mu) ** 2, axis=-1, keepdims=True)
    return (x - mu) * jax.lax.rsqrt(var + _EPS) * g + b


def _nbytes(shape, dtype):
    n = 1
    for s in shape:
        n *= int(s)
    return n * jnp.dtype(dtype).itemsize


def _vmem_limit(block_bytes, extra_bytes=0):
    # 2x for double-buffered pipelining + headroom for in-kernel temporaries.
    need = 2 * block_bytes + extra_bytes + (4 << 20)
    return int(min(max(need, 16 << 20), 64 << 20))


def _pick_tile(n, candidates=(1024, 512, 256, 128, 64, 32, 16, 8)):
    for c in candidates:
        if n % c == 0:
            return c
    return n


# --------------------------------------------------------------------------
# input_proj pass 1: 1x1 conv (channel matmul) + per-channel sum / sumsq stats
# (GroupNorm normalization is folded into the fused head kernel.)
# --------------------------------------------------------------------------

def _conv1x1_stats_kernel(x_ref, w_ref, b_ref, y_ref, stats_ref):
    t = pl.program_id(1)
    y = jnp.dot(x_ref[0], w_ref[...],
                preferred_element_type=jnp.float32) + b_ref[...]      # (hw_tile, Cout) f32
    y_ref[0] = y.astype(jnp.bfloat16)

    part = jnp.concatenate([jnp.sum(y, axis=0, keepdims=True),
                            jnp.sum(y * y, axis=0, keepdims=True)], axis=0)  # (2, Cout)

    @pl.when(t == 0)
    def _():
        stats_ref[0] = part

    @pl.when(t != 0)
    def _():
        stats_ref[0] = stats_ref[0] + part


def conv1x1_proj_stats(x_bf16, p):
    # TODO(synk): at very large HW the f32 sum/sumsq accumulation could switch
    # to a Welford-style update for better numerical behaviour.
    B, HW, Cin = x_bf16.shape
    Cout = p['w'].shape[1]
    hw_tile = _pick_tile(HW)
    w_b = p['w'].astype(jnp.bfloat16)
    bias = p['b'].astype(jnp.float32)

    blk = (_nbytes((1, hw_tile, Cin), jnp.bfloat16)
           + _nbytes((Cin, Cout), jnp.bfloat16)
           + _nbytes((1, Cout), jnp.float32)
           + _nbytes((1, hw_tile, Cout), jnp.bfloat16)
           + _nbytes((1, 2, Cout), jnp.float32))
    extra = hw_tile * Cout * 4 * 2   # f32 y temporary + slack

    y, stats = pl.pallas_call(
        _conv1x1_stats_kernel,
        out_shape=(jax.ShapeDtypeStruct((B, HW, Cout), jnp.bfloat16),
                   jax.ShapeDtypeStruct((B, 2, Cout), jnp.float32)),
        grid=(B, HW // hw_tile),
        in_specs=[
            pl.BlockSpec((1, hw_tile, Cin), lambda b, t: (b, t, 0)),
            pl.BlockSpec((Cin, Cout), lambda b, t: (0, 0)),
            pl.BlockSpec((1, Cout), lambda b, t: (0, 0)),
        ],
        out_specs=(pl.BlockSpec((1, hw_tile, Cout), lambda b, t: (b, t, 0)),
                   pl.BlockSpec((1, 2, Cout), lambda b, t: (b, 0, 0))),
        compiler_params=pltpu.CompilerParams(
            dimension_semantics=("parallel", "arbitrary"),
            vmem_limit_bytes=_vmem_limit(blk, extra)),
    )(x_bf16, w_b, bias)
    return y, stats


# --------------------------------------------------------------------------
# mlp_mapping: Linear -> LayerNorm -> ReLU -> Dropout(eval=id) -> Linear -> LN -> ReLU
# --------------------------------------------------------------------------

def _mlp_mapping_kernel(x_ref, w1_ref, w2_ref, vec_ref, o_ref):
    x = x_ref[...]                                         # bf16 (pre-cast in wrapper)
    vecs = vec_ref[...]                                    # (6, dout): b1,g1,be1,b2,g2,be2
    h = jnp.dot(x, w1_ref[...], preferred_element_type=jnp.float32) + vecs[0:1, :]
    h = jnp.maximum(_ln(h, vecs[1:2, :], vecs[2:3, :]), 0.0)
    h = jnp.dot(h.astype(jnp.bfloat16), w2_ref[...],
                preferred_element_type=jnp.float32) + vecs[3:4, :]
    o_ref[...] = jnp.maximum(_ln(h, vecs[4:5, :], vecs[5:6, :]), 0.0)


def mlp_mapping_apply(x2d, p, row_tile=512):
    x2d = x2d.astype(jnp.bfloat16)                         # halve the input DMA
    n, din = x2d.shape
    dout = p['w1'].shape[1]
    tile = min(row_tile, n)
    if tile == n and n % 16 == 0:
        tile = n // 2                                      # >=2 grid steps for v7x's 2nd TC
    w1 = p['w1'].astype(jnp.bfloat16)
    w2 = p['w2'].astype(jnp.bfloat16)
    vecs = jnp.concatenate([p['b1'], p['g1'], p['be1'],
                            p['b2'], p['g2'], p['be2']], axis=0)      # (6, dout)

    blk = (_nbytes((tile, din), jnp.bfloat16) + _nbytes((din, dout), jnp.bfloat16)
           + _nbytes((dout, dout), jnp.bfloat16) + _nbytes((6, dout), jnp.float32)
           + _nbytes((tile, dout), jnp.float32))
    extra = tile * dout * 4 * 2

    return pl.pallas_call(
        _mlp_mapping_kernel,
        out_shape=jax.ShapeDtypeStruct((n, dout), jnp.float32),
        grid=(pl.cdiv(n, tile),),
        in_specs=[
            pl.BlockSpec((tile, din), lambda i: (i, 0)),
            pl.BlockSpec((din, dout), lambda i: (0, 0)),
            pl.BlockSpec((dout, dout), lambda i: (0, 0)),
            pl.BlockSpec((6, dout), lambda i: (0, 0)),
        ],
        out_specs=pl.BlockSpec((tile, dout), lambda i: (i, 0)),
        compiler_params=pltpu.CompilerParams(
            dimension_semantics=("parallel",),
            vmem_limit_bytes=_vmem_limit(blk, extra)),
    )(x2d, w1, w2, vecs)


# --------------------------------------------------------------------------
# Fused head: GroupNorm normalize -> QueryEncoder -> query/query_pos ->
#             decoder cross-attn (split lang/img memory) -> bbox MLP + sigmoid
# --------------------------------------------------------------------------

def _fused_head_kernel(lang_ref, img_ref, stats_ref, gsel_ref, ppf_ref,
                       posl_ref, posr_ref, smask_ref,
                       mats_ref, vecs_ref, qe_ref, bw3_ref, bb3_ref,
                       o_ref, *, gn_cnt):
    f32, bf16 = jnp.float32, jnp.bfloat16

    ctx = lang_ref[0]                     # (L, D) f32   mapped sentence feats == memory_lang
    lqf = ppf_ref[0]                      # (n_ph, D)    mapped phrase pooled feats
    vecs = vecs_ref[...]                  # (22, D) packed bias/gamma/beta vectors
    n_ph, D = lqf.shape
    L = ctx.shape[0]

    def row(i):
        return vecs[i:i + 1, :]

    def mm(a, idx):                       # (n, D) @ stacked (D, D) -> f32
        return jnp.dot(a.astype(bf16), mats_ref[idx], preferred_element_type=f32)

    def dot_t(a, b):                      # (m, d) x (n, d) -> (m, n), contract last dims
        return jax.lax.dot_general(a.astype(bf16), b.astype(bf16),
                                   (((1,), (1,)), ((), ())),
                                   preferred_element_type=f32)

    def softmax(scores):
        s = scores - jnp.max(scores, axis=-1, keepdims=True)
        e = jnp.exp(s)
        return e * pl.reciprocal(jnp.sum(e, axis=-1, keepdims=True), approx=True)

    # ---- GroupNorm normalize of the projected image (pass 2, folded in) ----
    gsel = gsel_ref[...]                                        # (D, G) one-hot
    stats = stats_ref[0]                                        # (2, D): sum_c, sumsq_c
    mean_g = jnp.dot(stats[0:1, :], gsel, preferred_element_type=f32) / gn_cnt
    ex2_g = jnp.dot(stats[1:2, :], gsel, preferred_element_type=f32) / gn_cnt
    var_g = jnp.maximum(ex2_g - mean_g * mean_g, 0.0)           # clamp E[x^2]-E[x]^2 >= 0
    # broadcast group stats back to channels without transposing gsel
    mean_c = jax.lax.dot_general(mean_g, gsel, (((1,), (1,)), ((), ())),
                                 preferred_element_type=f32)
    rstd_c = jax.lax.dot_general(jax.lax.rsqrt(var_g + _EPS), gsel,
                                 (((1,), (1,)), ((), ())),
                                 preferred_element_type=f32)
    img = ((img_ref[0].astype(f32) - mean_c) * rstd_c * row(_V_GNG)
           + row(_V_GNB)).astype(bf16)                          # (HW, D) bf16

    # ---- QueryEncoder -------------------------------------------------------
    ctx0 = ctx[0:1, :]                                          # lang_context[:, 0, :]
    k = mm(ctx0, _M_WL1) + row(_V_BL1)                          # (1, D)
    q = mm(ctx, _M_WL2) + row(_V_BL2)                           # (L, D)
    v = (mm(ctx, _M_WL3) + row(_V_BL3)).astype(bf16)            # (L, D)
    att = jnp.broadcast_to(dot_t(k, q), (n_ph, L))
    # phrase-span mask built in-kernel from (pos_l, pos_r) ints (no (n_ph,L) DMA)
    tpos = jax.lax.broadcasted_iota(jnp.int32, (n_ph, L), 1)
    in_span = (tpos >= posl_ref[0]) & (tpos < posr_ref[0])
    att = jnp.where(in_span, att, _NEG)
    # NOTE: a fully-masked phrase row stays finite here (PyTorch would NaN).
    aw = softmax(att)                                           # (n_ph, L)
    cf = jnp.dot(aw.astype(bf16), v, preferred_element_type=f32)
    cf = _ln(mm(cf, _M_WC) + row(_V_BC), row(_V_GC), row(_V_BEC))   # context_out
    cf = ctx0 + cf                                              # + lang_context[:, 0, :]
    # fuse_encoder_query on cat([cf, lqf]) == cf @ W1[:D] + lqf @ W1[D:]
    h = mm(cf, _M_FW1A) + mm(lqf, _M_FW1B) + row(_V_FB1)
    h = jnp.maximum(_ln(h, row(_V_FG1), row(_V_FBE1)), 0.0)
    h = mm(h, _M_FW2) + row(_V_FB2)
    fused = jnp.maximum(_ln(h, row(_V_FG2), row(_V_FBE2)), 0.0)     # (n_ph, D)

    # ---- query / query_pos construction -------------------------------------
    qe_a = qe_ref[0]                                            # (n_q, D) query half
    qe_b = qe_ref[1]                                            # (n_q, D) query_pos half
    n_q = qe_a.shape[0]
    if n_q == 1:
        query = fused + qe_a
        qpos = fused + qe_b
    else:
        query = (fused[:, None, :] + qe_a[None, :, :]).reshape(n_ph * n_q, D)
        qpos = (fused[:, None, :] + qe_b[None, :, :]).reshape(n_ph * n_q, D)

    # ---- decoder -------------------------------------------------------------
    # TODO(synk): vl_transformer.decoder internals not provided; single-layer
    # single-head cross-attention + residual + LayerNorm stands in for it
    # (tgt_key_padding_mask unused, memory positional embedding is zero/omitted).
    # memory = [lang ; img] is kept split; the softmax is joint over S = L + HW.
    k_l = (mm(ctx, _M_WK) + row(_V_BK)).astype(bf16)            # (L, D)
    v_l = (mm(ctx, _M_WV) + row(_V_BV)).astype(bf16)
    k_i = (mm(img, _M_WK) + row(_V_BK)).astype(bf16)            # (HW, D)
    v_i = (mm(img, _M_WV) + row(_V_BV)).astype(bf16)
    q_d = (mm(query + qpos, _M_WQ) + row(_V_BQ)).astype(bf16)   # 1/sqrt(D) folded in WQ/BQ
    att_l = dot_t(q_d, k_l)                                     # (Nt, L)
    att_i = dot_t(q_d, k_i)                                     # (Nt, HW)
    smask = smask_ref[0]                                        # (1, L) int32, 1 = valid
    att_l = jnp.where(smask > 0, att_l, _NEG)                   # image tokens unmasked
    m = jnp.maximum(jnp.max(att_l, axis=-1, keepdims=True),
                    jnp.max(att_i, axis=-1, keepdims=True))
    e_l = jnp.exp(att_l - m)
    e_i = jnp.exp(att_i - m)
    denom = jnp.sum(e_l, axis=-1, keepdims=True) + jnp.sum(e_i, axis=-1, keepdims=True)
    inv = pl.reciprocal(denom, approx=True)
    out = (jnp.dot((e_l * inv).astype(bf16), v_l, preferred_element_type=f32)
           + jnp.dot((e_i * inv).astype(bf16), v_i, preferred_element_type=f32))
    out = mm(out, _M_WO) + row(_V_BO)
    hs = _ln(query + out, row(_V_GD), row(_V_BD))               # (Nt, D)

    # ---- bbox MLP + sigmoid (output padded to 128 lanes for a dense store) ---
    h = jnp.maximum(mm(hs, _M_BW1) + row(_V_BB1), 0.0)
    h = jnp.maximum(mm(h, _M_BW2) + row(_V_BB2), 0.0)
    box = jnp.dot(h.astype(bf16), bw3_ref[...],
                  preferred_element_type=f32) + bb3_ref[...]
    o_ref[0] = jax.nn.sigmoid(box)


def _prep_fused_weights(params, D):
    qe_p = params['query_encoder']
    dec = params['decoder']
    bb = params['bbox']
    ip = params['input_proj']
    scale = 1.0 / (D ** 0.5)

    (wl1, bl1), (wl2, bl2), (wl3, bl3) = qe_p['l1'], qe_p['l2'], qe_p['l3']
    wc, bc = qe_p['ctx_out_lin']
    gc, bec = qe_p['ctx_out_ln']
    f = qe_p['fuse']
    (wq, bq), (wk, bk), (wv, bv), (wo, bo) = dec['wq'], dec['wk'], dec['wv'], dec['wo']
    gd, bd = dec['ln']
    (bw1, bb1), (bw2, bb2), (bw3, bb3) = bb['l1'], bb['l2'], bb['l3']

    fw1 = f['w1']                                               # (2D, D)
    mats = jnp.stack([
        wl1, wl2, wl3, wc,
        fw1[:D], fw1[D:], f['w2'],
        wq * scale, wk, wv, wo,
        bw1, bw2,
    ]).astype(jnp.bfloat16)                                     # (13, D, D)

    vecs = jnp.concatenate([
        bl1, bl2, bl3, bc, gc, bec,
        f['b1'], f['g1'], f['be1'], f['b2'], f['g2'], f['be2'],
        bq * scale, bk, bv, bo, gd, bd,
        bb1, bb2,
        ip['gamma'], ip['beta'],
    ], axis=0).astype(jnp.float32)                              # (22, D)

    qe_w = qe_p['query_embed']                                  # (n_q, 2D)
    qe_split = jnp.stack([qe_w[:, :D], qe_w[:, D:]])            # (2, n_q, D)

    pad = max(128 - bw3.shape[1], 0)
    bw3p = jnp.pad(bw3, ((0, 0), (0, pad))).astype(jnp.bfloat16)   # (D, 128)
    bb3p = jnp.pad(bb3, ((0, 0), (0, pad))).astype(jnp.float32)    # (1, 128)
    return mats, vecs, qe_split, bw3p, bb3p


def fused_head_apply(lang, img_raw, gn_stats, ppf, pos_l, pos_r, smask,
                     params, *, n_q):
    B, L, D = lang.shape
    HW = img_raw.shape[1]
    n_ph = ppf.shape[1]
    Nt = n_ph * n_q
    gsel = params['input_proj']['gsel']
    G = gsel.shape[1]
    gn_cnt = float(HW * (D // G))
    mats, vecs, qe_split, bw3p, bb3p = _prep_fused_weights(params, D)

    per_step = [((1, L, D), lang.dtype), ((1, HW, D), img_raw.dtype),
                ((1, 2, D), gn_stats.dtype), ((D, G), gsel.dtype),
                ((1, n_ph, D), ppf.dtype), ((1, n_ph, 1), pos_l.dtype),
                ((1, n_ph, 1), pos_r.dtype), ((1, 1, L), smask.dtype),
                (mats.shape, mats.dtype), (vecs.shape, vecs.dtype),
                (qe_split.shape, qe_split.dtype), (bw3p.shape, bw3p.dtype),
                (bb3p.shape, bb3p.dtype), ((1, Nt, 128), jnp.float32)]
    blk = sum(_nbytes(s, d) for s, d in per_step)
    extra = HW * D * (4 + 4 * 2) + Nt * (L + HW) * 4 * 3        # img f32 temp, k/v, scores

    out = pl.pallas_call(
        functools.partial(_fused_head_kernel, gn_cnt=gn_cnt),
        out_shape=jax.ShapeDtypeStruct((B, Nt, 128), jnp.float32),
        grid=(B,),
        in_specs=[
            pl.BlockSpec((1, L, D), lambda b: (b, 0, 0)),
            pl.BlockSpec((1, HW, D), lambda b: (b, 0, 0)),
            pl.BlockSpec((1, 2, D), lambda b: (b, 0, 0)),
            pl.BlockSpec((D, G), lambda b: (0, 0)),
            pl.BlockSpec((1, n_ph, D), lambda b: (b, 0, 0)),
            pl.BlockSpec((1, n_ph, 1), lambda b: (b, 0, 0)),
            pl.BlockSpec((1, n_ph, 1), lambda b: (b, 0, 0)),
            pl.BlockSpec((1, 1, L), lambda b: (b, 0, 0)),
            pl.BlockSpec(mats.shape, lambda b: (0, 0, 0)),
            pl.BlockSpec(vecs.shape, lambda b: (0, 0)),
            pl.BlockSpec(qe_split.shape, lambda b: (0, 0, 0)),
            pl.BlockSpec(bw3p.shape, lambda b: (0, 0)),
            pl.BlockSpec(bb3p.shape, lambda b: (0, 0)),
        ],
        out_specs=pl.BlockSpec((1, Nt, 128), lambda b: (b, 0, 0)),
        compiler_params=pltpu.CompilerParams(
            dimension_semantics=("parallel",),
            vmem_limit_bytes=_vmem_limit(blk, extra)),
    )(lang, img_raw, gn_stats, gsel, ppf, pos_l, pos_r, smask,
      mats, vecs, qe_split, bw3p, bb3p)
    return out[..., :4]                                         # un-pad the 128-lane store


# --------------------------------------------------------------------------
# Parameters (deterministic, synthetic)
# --------------------------------------------------------------------------

def make_params(key, *, d, lang_d, cin, n_q, groups=32):
    ks = iter(jax.random.split(key, 64))

    def lin(din, dout, scale=0.02, zero=False):
        w = (jnp.zeros((din, dout), jnp.float32) if zero
             else scale * jax.random.normal(next(ks), (din, dout), jnp.float32))
        return w, jnp.zeros((1, dout), jnp.float32)

    def ln(dout):
        return jnp.ones((1, dout), jnp.float32), jnp.zeros((1, dout), jnp.float32)

    def mlp(din, dout):
        w1, b1 = lin(din, dout); g1, be1 = ln(dout)
        w2, b2 = lin(dout, dout); g2, be2 = ln(dout)
        return dict(w1=w1, b1=b1, g1=g1, be1=be1, w2=w2, b2=b2, g2=g2, be2=be2)

    cpg = d // groups
    gsel = (jnp.arange(d)[:, None] // cpg == jnp.arange(groups)[None, :]).astype(jnp.float32)
    wp, bp = lin(cin, d)          # nn.Conv2d(cin, d, 1) weight; bias init to 0
    gg, gb = ln(d)                # GroupNorm affine
    return {
        'input_proj': dict(w=wp, b=bp, gamma=gg, beta=gb, gsel=gsel),
        'map_sentence': mlp(lang_d, d),
        'map_phrase': mlp(lang_d, d),
        'query_encoder': {
            'query_embed': 0.02 * jax.random.normal(next(ks), (n_q, 2 * d), jnp.float32),
            'l1': lin(d, d), 'l2': lin(d, d), 'l3': lin(d, d),
            'ctx_out_lin': lin(d, d), 'ctx_out_ln': ln(d),
            'fuse': mlp(2 * d, d),
        },
        'decoder': {'wq': lin(d, d), 'wk': lin(d, d), 'wv': lin(d, d),
                    'wo': lin(d, d), 'ln': ln(d)},
        # bbox_embed last layer weight/bias are zero-initialized (per RefTR.__init__)
        'bbox': {'l1': lin(d, d), 'l2': lin(d, d), 'l3': lin(d, 4, zero=True)},
    }


# --------------------------------------------------------------------------
# RefTR forward
# --------------------------------------------------------------------------

def reftr_forward(params, samples, *, n_q):
    img_feat = samples['img_feat']                 # (B, H*W, Cin)  stubbed img_backbone output
    sentence_feat = samples['sentence_feat']       # (B, L, lang_d) stubbed lang_backbone output
    sentence_mask = samples['sentence_mask']       # (B, L) int (1 = valid token)
    phrase_pooled = samples['phrase_pooled_feat']  # (B*n_ph, lang_d) stubbed BERT pooled output
    phrase_mask = samples['phrase_mask']           # (B, n_ph, Lp)
    p_pos_l = samples['phrase_pos_l']              # (B, n_ph)
    p_pos_r = samples['phrase_pos_r']              # (B, n_ph)

    B, HW, _ = img_feat.shape
    L = sentence_feat.shape[1]
    n_ph = p_pos_l.shape[1]
    D = params['input_proj']['w'].shape[1]

    # TODO(synk): img_backbone / sine positional encodings not provided; image
    # features arrive as inputs and positional embeddings are zero (omitted).
    # input_proj pass 1: bf16 projection + GroupNorm statistics (HW-tiled).
    y_raw, gn_stats = conv1x1_proj_stats(img_feat.astype(jnp.bfloat16),
                                         params['input_proj'])

    sf = mlp_mapping_apply(sentence_feat.reshape(B * L, -1),
                           params['map_sentence']).reshape(B, L, D)     # map_sentence
    ppf = mlp_mapping_apply(phrase_pooled,
                            params['map_phrase']).reshape(B, n_ph, D)   # map_phrase

    # masks are passed raw (ints); additive biases are built inside the kernel.
    pos_l = p_pos_l.astype(jnp.int32)[..., None]            # (B, n_ph, 1)
    pos_r = p_pos_r.astype(jnp.int32)[..., None]            # (B, n_ph, 1)
    smask = sentence_mask.astype(jnp.int32)[:, None, :]     # (B, 1, L)

    query_mask = jnp.logical_not(phrase_mask[:, :, 2:3].astype(bool))
    query_mask = jnp.broadcast_to(query_mask, (B, n_ph, n_q)).reshape(B, n_ph * n_q)

    # TODO(synk): vl_transformer.encode internals not provided; memory is the
    # (in-kernel, split) pair of mapped language features and projected image
    # features (language first, matching memory[:sentence_feat.size(1)] semantics).
    boxes = fused_head_apply(sf, y_raw, gn_stats, ppf, pos_l, pos_r, smask,
                             params, n_q=n_q)
    outputs_coord = boxes.reshape(1, B, n_ph, n_q, 4)                   # num_l = 1 (stub)
    return {'pred_boxes': outputs_coord[-1],
            'phrase_mask': jnp.logical_not(query_mask)}


# --------------------------------------------------------------------------

if __name__ == "__main__":
    B, D, LANG_D = 2, 32, 48
    H = W = 4
    CIN = 64
    L = 8
    N_PH, N_Q = 2, 1

    key = jax.random.PRNGKey(0)
    kp, k1, k2, k3 = jax.random.split(key, 4)
    params = make_params(kp, d=D, lang_d=LANG_D, cin=CIN, n_q=N_Q)

    samples = dict(
        img_feat=jax.random.normal(k1, (B, H * W, CIN), jnp.float32),
        sentence_feat=jax.random.normal(k2, (B, L, LANG_D), jnp.float32),
        sentence_mask=jnp.array([[1] * 8, [1] * 6 + [0] * 2], jnp.int32),
        phrase_pooled_feat=jax.random.normal(k3, (B * N_PH, LANG_D), jnp.float32),
        phrase_mask=jnp.ones((B, N_PH, 6), jnp.int32),
        phrase_pos_l=jnp.array([[1, 3], [0, 2]], jnp.int32),
        phrase_pos_r=jnp.array([[3, 5], [2, 4]], jnp.int32),
    )

    out = reftr_forward(params, samples, n_q=N_Q)
    jax.block_until_ready(out)
    pb = out['pred_boxes']
    assert pb.shape == (B, N_PH, N_Q, 4), pb.shape
    assert out['phrase_mask'].shape == (B, N_PH * N_Q)
    assert not bool(jnp.isnan(pb).any())
    print("KERNEL_OK")
</pallas_src>

<mosaic_0001>
module attributes {stable_mosaic.version = 11 : i64} {
  func.func @_conv1x1_stats_kernel(%arg0: i32, %arg1: i32, %arg2: memref<1x16x64xbf16, #tpu.memory_space<vmem>>, %arg3: memref<64x32xbf16, #tpu.memory_space<vmem>>, %arg4: memref<1x32xf32, #tpu.memory_space<vmem>>, %arg5: memref<1x16x32xbf16, #tpu.memory_space<vmem>>, %arg6: memref<1x2x32xf32, #tpu.memory_space<vmem>>) attributes {dimension_semantics = [#tpu.dimension_semantics<parallel>, #tpu.dimension_semantics<arbitrary>], iteration_bounds = array<i64: 2, 1>, scalar_prefetch = 0 : i64, scratch_operands = 0 : i64, tpu.core_type = #tpu.core_type<tc>, window_params = [{transform_indices = @transform_0, window_bounds = array<i64: 1, 16, 64>}, {pipeline_mode = #tpu.pipeline_mode<synchronous>, transform_indices = @transform_1, window_bounds = array<i64: 64, 32>}, {pipeline_mode = #tpu.pipeline_mode<synchronous>, transform_indices = @transform_2, window_bounds = array<i64: 1, 32>}, {transform_indices = @transform_3, window_bounds = array<i64: 1, 16, 32>}, {transform_indices = @transform_4, window_bounds = array<i64: 1, 2, 32>}]} {
    %c0 = arith.constant 0 : index
    %c0_0 = arith.constant 0 : index
    %c0_1 = arith.constant 0 : index
    %0 = vector.load %arg2[%c0, %c0_0, %c0_1] : memref<1x16x64xbf16, #tpu.memory_space<vmem>>, vector<1x16x64xbf16>
    %1 = vector.shape_cast %0 : vector<1x16x64xbf16> to vector<16x64xbf16>
    %c0_2 = arith.constant 0 : index
    %c0_3 = arith.constant 0 : index
    %2 = vector.load %arg3[%c0_2, %c0_3] : memref<64x32xbf16, #tpu.memory_space<vmem>>, vector<64x32xbf16>
    %cst = arith.constant dense<0.000000e+00> : vector<16x32xf32>
    %3 = tpu.matmul %1, %2, %cst {dimension_numbers = #tpu.dot_dimension_numbers<[1], [0], [0], [1], [0, 0, 1, 1], [], []>} : vector<16x64xbf16>, vector<64x32xbf16>, vector<16x32xf32> -> vector<16x32xf32>
    %c0_4 = arith.constant 0 : index
    %c0_5 = arith.constant 0 : index
    %4 = vector.load %arg4[%c0_4, %c0_5] : memref<1x32xf32, #tpu.memory_space<vmem>>, vector<1x32xf32>
    %5 = vector.broadcast %4 : vector<1x32xf32> to vector<16x32xf32>
    %6 = arith.addf %3, %5 : vector<16x32xf32>
    %7 = arith.truncf %6 : vector<16x32xf32> to vector<16x32xbf16>
    %c0_6 = arith.constant 0 : index
    %c0_7 = arith.constant 0 : index
    %c0_8 = arith.constant 0 : index
    %8 = vector.load %arg5[%c0_6, %c0_7, %c0_8] : memref<1x16x32xbf16, #tpu.memory_space<vmem>>, vector<1x16x32xbf16>
    %9 = vector.shape_cast %8 : vector<1x16x32xbf16> to vector<16x32xbf16>
    %10 = vector.shape_cast %7 : vector<16x32xbf16> to vector<1x16x32xbf16>
    tpu.vector_store %arg5[%c0_6, %c0_7, %c0_8], %10 {strides = array<i32>} : memref<1x16x32xbf16, #tpu.memory_space<vmem>>, vector<1x16x32xbf16>,
    %cst_9 = arith.constant dense<0.000000e+00> : vector<32xf32>
    %11 = vector.multi_reduction <add>, %6, %cst_9 [0] : vector<16x32xf32> to vector<32xf32>
    %12 = vector.shape_cast %11 : vector<32xf32> to vector<1x32xf32>
    %13 = arith.mulf %6, %6 : vector<16x32xf32>
    %cst_10 = arith.constant dense<0.000000e+00> : vector<32xf32>
    %14 = vector.multi_reduction <add>, %13, %cst_10 [0] : vector<16x32xf32> to vector<32xf32>
    %15 = vector.shape_cast %14 : vector<32xf32> to vector<1x32xf32>
    %16 = tpu.concatenate %12, %15 in 0 : vector<1x32xf32>, vector<1x32xf32> -> vector<2x32xf32>
    %c0_i32 = arith.constant 0 : i32
    %17 = arith.cmpi eq, %arg1, %c0_i32 : i32
    %18 = arith.extui %17 : i1 to i32
    %c0_i32_11 = arith.constant 0 : i32
    %19 = arith.cmpi ne, %18, %c0_i32_11 : i32
    scf.if %19 {
      %c0_14 = arith.constant 0 : index
      %c0_15 = arith.constant 0 : index
      %c0_16 = arith.constant 0 : index
      %23 = vector.load %arg6[%c0_14, %c0_15, %c0_16] : memref<1x2x32xf32, #tpu.memory_space<vmem>>, vector<1x2x32xf32>
      %24 = vector.shape_cast %23 : vector<1x2x32xf32> to vector<2x32xf32>
      %25 = vector.shape_cast %16 : vector<2x32xf32> to vector<1x2x32xf32>
      tpu.vector_store %arg6[%c0_14, %c0_15, %c0_16], %25 {strides = array<i32>} : memref<1x2x32xf32, #tpu.memory_space<vmem>>, vector<1x2x32xf32>,
    } else {
    }
    %c0_i32_12 = arith.constant 0 : i32
    %20 = arith.cmpi ne, %arg1, %c0_i32_12 : i32
    %21 = arith.extui %20 : i1 to i32
    %c0_i32_13 = arith.constant 0 : i32
    %22 = arith.cmpi ne, %21, %c0_i32_13 : i32
    scf.if %22 {
      %c0_14 = arith.constant 0 : index
      %c0_15 = arith.constant 0 : index
      %c0_16 = arith.constant 0 : index
      %23 = vector.load %arg6[%c0_14, %c0_15, %c0_16] : memref<1x2x32xf32, #tpu.memory_space<vmem>>, vector<1x2x32xf32>
      %24 = vector.shape_cast %23 : vector<1x2x32xf32> to vector<2x32xf32>
      %25 = arith.addf %24, %16 : vector<2x32xf32>
      %c0_17 = arith.constant 0 : index
      %c0_18 = arith.constant 0 : index
      %c0_19 = arith.constant 0 : index
      %26 = vector.load %arg6[%c0_17, %c0_18, %c0_19] : memref<1x2x32xf32, #tpu.memory_space<vmem>>, vector<1x2x32xf32>
      %27 = vector.shape_cast %26 : vector<1x2x32xf32> to vector<2x32xf32>
      %28 = vector.shape_cast %25 : vector<2x32xf32> to vector<1x2x32xf32>
      tpu.vector_store %arg6[%c0_17, %c0_18, %c0_19], %28 {strides = array<i32>} : memref<1x2x32xf32, #tpu.memory_space<vmem>>, vector<1x2x32xf32>,
    } else {
    }
    return
  }
  func.func @transform_0(%arg0: i32, %arg1: i32) -> (i32, i32, i32) {
    %c0_i32 = arith.constant 0 : i32
    %c0_i32_0 = arith.constant 0 : i32
    return %arg0, %arg1, %c0_i32 : i32, i32, i32
  }
  func.func @transform_1(%arg0: i32, %arg1: i32) -> (i32, i32) {
    %c0_i32 = arith.constant 0 : i32
    %c0_i32_0 = arith.constant 0 : i32
    %c0_i32_1 = arith.constant 0 : i32
    return %c0_i32, %c0_i32_0 : i32, i32
  }
  func.func @transform_2(%arg0: i32, %arg1: i32) -> (i32, i32) {
    %c0_i32 = arith.constant 0 : i32
    %c0_i32_0 = arith.constant 0 : i32
    %c0_i32_1 = arith.constant 0 : i32
    return %c0_i32, %c0_i32_0 : i32, i32
  }
  func.func @transform_3(%arg0: i32, %arg1: i32) -> (i32, i32, i32) {
    %c0_i32 = arith.constant 0 : i32
    %c0_i32_0 = arith.constant 0 : i32
    return %arg0, %arg1, %c0_i32 : i32, i32, i32
  }
  func.func @transform_4(%arg0: i32, %arg1: i32) -> (i32, i32, i32) {
    %c0_i32 = arith.constant 0 : i32
    %c0_i32_0 = arith.constant 0 : i32
    %c0_i32_1 = arith.constant 0 : i32
    return %arg0, %c0_i32, %c0_i32_0 : i32, i32, i32
  }
}

</mosaic_0001>

<llo_original>
// kernel: tpu_custom_call.1
$region0: #{tpu_custom_call.1}
  #allocation0 [shape = 'u32[]', space=smem, size = 0x4, offset = 0x4, fixed_abs, tag = 'smem constant byte address 0x4 - core index']
  #allocation1 [shape = 'u32[72,128]{1,0:T(1,128)}', space=vmem, size = 0x9000, scoped, tag = 'internal scratch']
  %s0 = inlined_call_operand.vmem [shape: bf16[2,16,64], index: 0, kind: input, shape index: {}]
  %s1 = inlined_call_operand.vmem [shape: bf16[64,32], index: 1, kind: input, shape index: {}]
  %s2 = inlined_call_operand.vmem [shape: f32[1,32], index: 2, kind: input, shape index: {}]
  %s3 = inlined_call_operand.hbm [shape: bf16[2,16,32], index: 3, kind: output, shape index: {0}]
  %s4 = inlined_call_operand.hbm [shape: f32[2,2,32], index: 4, kind: output, shape index: {1}]
  %5 = xla_tuple %s3, %s4
  %s6 = sld [smem:[#allocation0]]
  $region61: #{tpu_custom_call.1} parent=0
    _
  %s8 = ssub.s32 1, %s6
  %s9 = scalar_select 0, %s8, %s6
  $region1: #{tpu_custom_call.1} parent=0
    #allocation2 [shape = 'u8[8192]{0}', space=vmem, size = 0x2000, scoped, tag = 'output window, operand 0']
    #allocation3 [shape = 's32[2]{0}', space=sflag, size = 0x8, scoped, tag = 'scoped memory for tpu_custom_call.1']
    #allocation4 [shape = 'u8[2048]{0}', space=vmem, size = 0x800, scoped, tag = 'output window, operand 1']
    #allocation5 [shape = 's32[2]{0}', space=sflag, size = 0x8, scoped, tag = 'scoped memory for tpu_custom_call.1']
    %10 = vsyncpa [#allocation3], 0
    %s11 = scalar_lea.sflag [#allocation3], 1
    %12 = vsyncpa %s11, 0
    %13 = vsyncpa [#allocation5], 0
    %s14 = scalar_lea.sflag [#allocation5], 1
    %15 = vsyncpa %s14, 0
    loop: start=0, step=1, limit=4
    $region2: #{tpu_custom_call.1} parent=1 // loop_pre_header
      _
    $region3: #{tpu_custom_call.1} parent=1 // loop_header
      %s17 = sphi 0, %s21
      %p18 = scmp.ge.s32.totalorder %s17, 4
      %s24 = sphi 0, %s36
      %s25 = sphi 0, %s32
      %s26 = sphi 0, %s24
      %s27 = sphi 0, %s25
      %s28 = sphi 0, %s26
      %s29 = sphi 0, %s27
      %s41 = sphi 0, %s43
      %s44 = sphi 0, %s41
      %s45 = sphi 0, %s44
      %s61 = sphi 0, %s45
      %s65 = sphi 0, %s65
      %s67 = sphi 0, %s65
      %s68 = sphi 0, %s67
      %s82 = sphi 0, %s68
      %s86 = sphi 0, %s86
      %s88 = sphi 0, %s86
      %s89 = sphi 0, %s88
      %s103 = sphi 0, %s89
      %s111 = sphi 0, %s113
      %s114 = sphi 0, %s111
      %s115 = sphi 0, %s114
      %s131 = sphi 0, %s115
      %s137 = sphi 0, %s139
      %s140 = sphi 0, %s137
      %s141 = sphi 0, %s140
      %s157 = sphi 0, %s141
    $region4: #{tpu_custom_call.1} parent=1 // loop_header_branch
      %20 = sbr.rel (%p18) target = $region8
    $region5: #{tpu_custom_call.1} parent=1 // loop_body
      %s22 = ssub.s32 %s17, 1
      %s23 = ssub.s32 %s17, 2
      %s30 = sadd.s32 1, %s25
      %p31 = scmp.ge.s32.totalorder %s30, 1
      %s32 = scalar_select %p31, 0, %s30
      %s33 = sadd.s32 1, %s24
      %s34 = scalar_select %p31, %s33, %s24
      %p35 = scmp.ge.s32.totalorder %s34, 2
      %s36 = scalar_select %p35, 0, %s34
      %s37 = ssub.s32 %s24, %s36
      %s38 = ssub.s32 %s25, %s32
      %s39 = sor.u32 %s37, %s38
      %p40 = scmp.eq.s32.totalorder %s39, 0
      %s42 = sadd.s32 %s41, 1
      %s43 = scalar_select %p40, %s41, %s42
      %p46 = pneg %p40
      %p47 = scmp.eq.s32.totalorder %s17, 1
      %p48 = por %p46, %p47
      %p49 = scmp.ne.s32.totalorder %s41, %s44
      %p50 = scmp.eq.s32.totalorder %s17, 0
      %p51 = por %p49, %p50
      %p52 = scmp.ne.s32.totalorder %s41, %s44
      %p53 = scmp.eq.s32.totalorder %s22, 1
      %p54 = por %p52, %p53
      %p55 = scmp.ne.s32.totalorder %s44, %s45
      %p56 = scmp.eq.s32.totalorder %s22, 0
      %p57 = por %p55, %p56
      %p58 = scmp.ne.s32.totalorder %s44, %s45
      %p59 = scmp.eq.s32.totalorder %s23, 1
      %p60 = por %p58, %p59
      %p62 = scmp.ne.s32.totalorder %s45, %s61
      %p63 = scmp.eq.s32.totalorder %s23, 0
      %p64 = por %p62, %p63
      %s66 = sadd.s32 %s65, 1
      %p69 = scmp.eq.s32.totalorder %s17, 1
      %p70 = scmp.ne.s32.totalorder %s65, %s67
      %p71 = scmp.eq.s32.totalorder %s17, 0
      %p72 = por %p70, %p71
      %p73 = scmp.ne.s32.totalorder %s65, %s67
      %p74 = scmp.eq.s32.totalorder %s22, 1
      %p75 = por %p73, %p74
      %p76 = scmp.ne.s32.totalorder %s67, %s68
      %p77 = scmp.eq.s32.totalorder %s22, 0
      %p78 = por %p76, %p77
      %p79 = scmp.ne.s32.totalorder %s67, %s68
      %p80 = scmp.eq.s32.totalorder %s23, 1
      %p81 = por %p79, %p80
      %p83 = scmp.ne.s32.totalorder %s68, %s82
      %p84 = scmp.eq.s32.totalorder %s23, 0
      %p85 = por %p83, %p84
      %s87 = sadd.s32 %s86, 1
      %p90 = scmp.eq.s32.totalorder %s17, 1
      %p91 = scmp.ne.s32.totalorder %s86, %s88
      %p92 = scmp.eq.s32.totalorder %s17, 0
      %p93 = por %p91, %p92
      %p94 = scmp.ne.s32.totalorder %s86, %s88
      %p95 = scmp.eq.s32.totalorder %s22, 1
      %p96 = por %p94, %p95
      %p97 = scmp.ne.s32.totalorder %s88, %s89
      %p98 = scmp.eq.s32.totalorder %s22, 0
      %p99 = por %p97, %p98
      %p100 = scmp.ne.s32.totalorder %s88, %s89
      %p101 = scmp.eq.s32.totalorder %s23, 1
      %p102 = por %p100, %p101
      %p104 = scmp.ne.s32.totalorder %s89, %s103
      %p105 = scmp.eq.s32.totalorder %s23, 0
      %p106 = por %p104, %p105
      %s107 = ssub.s32 %s24, %s36
      %s108 = ssub.s32 %s25, %s32
      %s109 = sor.u32 %s107, %s108
      %p110 = scmp.eq.s32.totalorder %s109, 0
      %s112 = sadd.s32 %s111, 1
      %s113 = scalar_select %p110, %s111, %s112
      %p116 = pneg %p110
      %p117 = scmp.eq.s32.totalorder %s17, 1
      %p118 = por %p116, %p117
      %p119 = scmp.ne.s32.totalorder %s111, %s114
      %p120 = scmp.eq.s32.totalorder %s17, 0
      %p121 = por %p119, %p120
      %p122 = scmp.ne.s32.totalorder %s111, %s114
      %p123 = scmp.eq.s32.totalorder %s22, 1
      %p124 = por %p122, %p123
      %p125 = scmp.ne.s32.totalorder %s114, %s115
      %p126 = scmp.eq.s32.totalorder %s22, 0
      %p127 = por %p125, %p126
      %p128 = scmp.ne.s32.totalorder %s114, %s115
      %p129 = scmp.eq.s32.totalorder %s23, 1
      %p130 = por %p128, %p129
      %p132 = scmp.ne.s32.totalorder %s115, %s131
      %p133 = scmp.eq.s32.totalorder %s23, 0
      %p134 = por %p132, %p133
      %s135 = ssub.s32 %s24, %s36
      %p136 = scmp.eq.s32.totalorder %s135, 0
      %s138 = sadd.s32 %s137, 1
      %s139 = scalar_select %p136, %s137, %s138
      %p142 = pneg %p136
      %p143 = scmp.eq.s32.totalorder %s17, 1
      %p144 = por %p142, %p143
      %p145 = scmp.ne.s32.totalorder %s137, %s140
      %p146 = scmp.eq.s32.totalorder %s17, 0
      %p147 = por %p145, %p146
      %p148 = scmp.ne.s32.totalorder %s137, %s140
      %p149 = scmp.eq.s32.totalorder %s22, 1
      %p150 = por %p148, %p149
      %p151 = scmp.ne.s32.totalorder %s140, %s141
      %p152 = scmp.eq.s32.totalorder %s22, 0
      %p153 = por %p151, %p152
      %p154 = scmp.ne.s32.totalorder %s140, %s141
      %p155 = scmp.eq.s32.totalorder %s23, 1
      %p156 = por %p154, %p155
      %p158 = scmp.ne.s32.totalorder %s141, %s157
      %p159 = scmp.eq.s32.totalorder %s23, 0
      %p160 = por %p158, %p159
      %p161 = scmp.le.s32.totalorder 1, %s17
      %p162 = scmp.lt.s32.totalorder %s17, 3
      %p163 = pnand %p161, %p162
      %p164 = pneg %p163
      // Predicated region
      $region9: #{tpu_custom_call.1} parent=5 // pred_check
        _
      $region10: #{tpu_custom_call.1} parent=5 // pred_check_branch
        %166 = sbr.rel (%p163) target = $region12
      $region11: #{tpu_custom_call.1} parent=5 // pred_region
        %s167 = ssub.s32 %s17, 1
        // Predicated region
        $region13: #{tpu_custom_call.1} parent=11 // pred_check
          %p168 = pneg %p78
        $region14: #{tpu_custom_call.1} parent=11 // pred_check_branch
          %170 = sbr.rel (%p168) target = $region16
        $region15: #{tpu_custom_call.1} parent=11 // pred_region
          _
        $region16: #{tpu_custom_call.1} parent=11 // pred_fallthru
          _
        // Predicated region
        $region17: #{tpu_custom_call.1} parent=11 // pred_check
          %p171 = pneg %p99
        $region18: #{tpu_custom_call.1} parent=11 // pred_check_branch
          %173 = sbr.rel (%p171) target = $region20
        $region19: #{tpu_custom_call.1} parent=11 // pred_region
          _
        $region20: #{tpu_custom_call.1} parent=11 // pred_fallthru
          _
      $region12: #{tpu_custom_call.1} parent=5 // pred_fallthru
        _
      %p174 = scmp.lt.s32.totalorder %s17, 2
      // Predicated region
      $region21: #{tpu_custom_call.1} parent=5 // pred_check
        %p175 = pneg %p174
      $region22: #{tpu_custom_call.1} parent=5 // pred_check_branch
        %177 = sbr.rel (%p175) target = $region24
      $region23: #{tpu_custom_call.1} parent=5 // pred_region
        // Predicated region
        $region25: #{tpu_custom_call.1} parent=23 // pred_check
          %p178 = pneg %p51
        $region26: #{tpu_custom_call.1} parent=23 // pred_check_branch
          %180 = sbr.rel (%p178) target = $region28
        $region27: #{tpu_custom_call.1} parent=23 // pred_region
          %s181 = smul.u32 2, %s25
          %p182 = scmp.lt.s32.totalorder %s24, 1
          %s183 = scalar_select %p182, %s24, 1
          %p184 = scmp.lt.s32.totalorder %s181, 1
          %s185 = scalar_select %p184, %s181, 1
          %s186 = smul.addr %s183, 2
          %s187 = sadd.s32 %s185, %s186
          %s188 = smul.addr %s187, 4
          %s189 = scalar_lea.vmem %s0, %s188
          %s190 = smul.u32 2, %s25
        $region28: #{tpu_custom_call.1} parent=23 // pred_fallthru
          _
      $region24: #{tpu_custom_call.1} parent=5 // pred_fallthru
        _
      %p191 = scmp.le.s32.totalorder 1, %s17
      %p192 = scmp.lt.s32.totalorder %s17, 3
      %p193 = pnand %p191, %p192
      %p194 = pneg %p193
      // Predicated region
      $region29: #{tpu_custom_call.1} parent=5 // pred_check
        _
      $region30: #{tpu_custom_call.1} parent=5 // pred_check_branch
        %196 = sbr.rel (%p193) target = $region32
      $region31: #{tpu_custom_call.1} parent=5 // pred_region
        %s197 = ssub.s32 %s17, 1
        %s198 = smul.u32 2, %s27
        %p199 = scmp.lt.s32.totalorder %s26, 1
        %s200 = scalar_select %p199, %s26, 1
        %p201 = scmp.lt.s32.totalorder %s198, 1
        %s202 = scalar_select %p201, %s198, 1
        %s203 = smul.addr %s200, 2
        %s204 = sadd.s32 %s202, %s203
        %s205 = smul.addr %s204, 4
        %s206 = scalar_lea.vmem %s0, %s205
        %p207 = pneg %p57
        %p208 = pneg %p54
        %p209 = pneg %p78
        %p210 = pneg %p75
        %p211 = pneg %p99
        %p212 = pneg %p96
        %p213 = pneg %p127
        %p214 = pneg %p124
        %s215 = sand.u32 %s114, 1
        %s216 = scalar_lea.sflag [#allocation3], %s215
        %s217 = sand.u32 %s114, 1
        %s218 = smul.addr %s217, 8
        %s219 = scalar_lea.vmem [#allocation2], %s218
        %p220 = pneg %p153
        %p221 = pneg %p150
        %s222 = sand.u32 %s140, 1
        %s223 = scalar_lea.sflag [#allocation5], %s222
        %s224 = sand.u32 %s140, 1
        %s225 = smul.addr %s224, 2
        %s226 = scalar_lea.vmem [#allocation4], %s225
        %s227 = smul.u32 2, %s27
        %p228 = scmp.lt.s32.totalorder %s26, 1
        %s229 = scalar_select %p228, %s26, 1
        %p230 = scmp.lt.s32.totalorder %s227, 1
        %s231 = scalar_select %p230, %s227, 1
        %s232 = smul.addr %s229, 2
        %s233 = sadd.s32 %s231, %s232
        %s234 = smul.addr %s233, 4
        %s235 = scalar_lea.vmem %s0, %s234
        %s236 = smul.u32 2, %s27
        %s237 = smul.u32 2, %s27
        %v239 = vld [vmem:[%s235] sm:$0xf]
        %v240 = vld [vmem:[%s235 + $0x4] sm:$0xf]
        %v241 = vld [vmem:[%s1] sm:$0xf]
        %v242 = vld [vmem:[%s1 + $0x4] sm:$0xf]
        %v243 = vld [vmem:[%s1 + $0x8] sm:$0xf]
        %v244 = vld [vmem:[%s1 + $0xc] sm:$0xf]
        %v245 = vld [vmem:[%s1 + $0x10] sm:$0xf]
        %v246 = vld [vmem:[%s1 + $0x14] sm:$0xf]
        %v247 = vld [vmem:[%s1 + $0x18] sm:$0xf]
        %v248 = vld [vmem:[%s1 + $0x1c] sm:$0xf]
        %v249 = vld [vmem:[%s2] sm:$0x1]
        %v251 = vperm.slane %v249, 0
        %v255 = vunpack.c.l.b16 %v239
        %v256 = vunpack.c.l.b16 %v240
        %v257 = vpack.c.b16 %v256, %v255
        %v266 = vunpack.c.l.b16 %v241
        %v267 = vunpack.c.l.b16 %v242
        %v268 = vunpack.c.l.b16 %v243
        %v269 = vunpack.c.l.b16 %v244
        %v270 = vunpack.c.l.b16 %v245
        %v271 = vunpack.c.l.b16 %v246
        %v272 = vunpack.c.l.b16 %v247
        %v273 = vunpack.c.l.b16 %v248
        %v274 = vpack.c.b16 %v267, %v266
        %v275 = vpack.c.b16 %v269, %v268
        %v276 = vpack.c.b16 %v271, %v270
        %v277 = vpack.c.b16 %v273, %v272
        %vm282 = vcmask 523264
        %v284 = vsel %vm282, %v257, 0
        %286 = vmatpush.bf16.msra.mxu0 0
        %287 = vmatpush.bf16.msra.mxu0 0
        %288 = vmatpush.bf16.msra.mxu0 0
        %289 = vmatpush.bf16.msra.mxu0 0
        %290 = vmatpush.bf16.msra.mxu0 %v277
        %291 = vmatpush.bf16.msra.mxu0 %v276
        %292 = vmatpush.bf16.msra.mxu0 %v275
        %293 = vmatpush.bf16.msra.mxu0 %v274
        %294 = vmatmul.bf16.gmra.mxu0 %v284
        %v295 = vpop.f32.mrf.mxu0
        %v296 = vadd.f32 %v251, %v295
        %v297 = vpop.f32.mrf.mxu0
        %v298 = vadd.f32 %v251, %v297
        %299 = vdwg.mxu0
        %v300 = vpack.c.bf16 %v296, %v296
        %v301 = vpack.c.bf16 %v298, %v298
        %vm302 = vcmask 257024
        %303 = vst.msk [vmem:[%s219] sm:$0xf] %vm302, %v300
        %304 = vst.msk [vmem:[%s219 + $0x4] sm:$0xf] %vm302, %v301
        %vm305 = vcmask 261120
        %v306 = vsel %vm305, %v296, 0.0
        %v307 = vsel %vm305, %v298, 0.0
        %v308 = vadd.f32 %v306, %v307
        %v309 = vrot.slane %v308, 4
        %v310 = vadd.f32 %v308, %v309
        %v311 = vrot.slane %v310, 2
        %v312 = vadd.f32 %v310, %v311
        %v313 = vrot.slane %v312, 1
        %v314 = vadd.f32 %v312, %v313
        %v315 = vmul.f32 %v296, %v296
        %v316 = vmul.f32 %v298, %v298
        %v317 = vsel %vm305, %v315, 0.0
        %v318 = vsel %vm305, %v316, 0.0
        %v319 = vadd.f32 %v317, %v318
        %v320 = vrot.slane %v319, 4
        %v321 = vadd.f32 %v319, %v320
        %v322 = vrot.slane %v321, 2
        %v323 = vadd.f32 %v321, %v322
        %v324 = vrot.slane %v323, 1
        %v325 = vadd.f32 %v323, %v324
        %vm326 = vcmask 1040384
        %v327 = vsel %vm326, %v314, %v325
        %p328 = scmp.eq.s32.totalorder %s27, 0
        // Predicated region
        $region33: #{tpu_custom_call.1} parent=31 // pred_check
          %p329 = pneg %p328
        $region34: #{tpu_custom_call.1} parent=31 // pred_check_branch
          %331 = sbr.rel (%p329) target = $region36
        $region35: #{tpu_custom_call.1} parent=31 // pred_region
          %vm332 = vcmask 254976
          %333 = vst.msk [vmem:[%s226] sm:$0x3] %vm332, %v327
        $region36: #{tpu_custom_call.1} parent=31 // pred_fallthru
          _
        %p334 = scmp.ne.s32.totalorder %s27, 0
        // Predicated region
        $region37: #{tpu_custom_call.1} parent=31 // pred_check
          %p335 = pneg %p334
        $region38: #{tpu_custom_call.1} parent=31 // pred_check_branch
          %337 = sbr.rel (%p335) target = $region40
        $region39: #{tpu_custom_call.1} parent=31 // pred_region
          %v338 = vld [vmem:[%s226] sm:$0x3]
          %v339 = vadd.f32 %v338, %v327
          %vm340 = vcmask 254976
          %341 = vst.msk [vmem:[%s226] sm:$0x3] %vm340, %v339
        $region40: #{tpu_custom_call.1} parent=31 // pred_fallthru
          _
        %s342 = sand.u32 %s114, 1
        %s343 = scalar_lea.sflag [#allocation3], %s342
        %s344 = sand.u32 %s114, 1
        %s345 = smul.addr %s344, 8
        %s346 = scalar_lea.vmem [#allocation2], %s345
        %s347 = sand.u32 %s140, 1
        %s348 = scalar_lea.sflag [#allocation5], %s347
        %s349 = sand.u32 %s140, 1
        %s350 = smul.addr %s349, 2
        %s351 = scalar_lea.vmem [#allocation4], %s350
        // Predicated region
        $region41: #{tpu_custom_call.1} parent=31 // pred_check
          %p352 = pneg %p124
        $region42: #{tpu_custom_call.1} parent=31 // pred_check_branch
          %354 = sbr.rel (%p352) target = $region44
        $region43: #{tpu_custom_call.1} parent=31 // pred_region
          %s355 = smul.u32 2, %s27
          %357 = vsyncadd %s343, 0
          %s358 = smul.addr %s26, 2
          %s359 = sadd.s32 %s355, %s358
          %s360 = smul.addr %s359, 4
          %s361 = scalar_lea.hbm %s3, %s360
          %s362 = sshll.u32 %s346, 4
          %s363 = int_to_ptr.vmem [resolvable:$true] %s362
          %s364 = sshll.u32 %s361, 4
          %s365 = int_to_ptr.hbm [resolvable:$true] %s364
          %370 = dma.vmem_to_hbm [thread:$0]  %s363, 128, %s365, %s343, 64, 64, 4
        $region44: #{tpu_custom_call.1} parent=31 // pred_fallthru
          _
        // Predicated region
        $region45: #{tpu_custom_call.1} parent=31 // pred_check
          %p371 = pneg %p150
        $region46: #{tpu_custom_call.1} parent=31 // pred_check_branch
          %373 = sbr.rel (%p371) target = $region48
        $region47: #{tpu_custom_call.1} parent=31 // pred_region
          %375 = vsyncadd %s348, 0
          %s376 = smul.addr %s26, 2
          %s377 = scalar_lea.hbm %s4, %s376
          %s379 = sshll.u32 %s351, 4
          %s380 = int_to_ptr.vmem [resolvable:$true] %s379
          %s381 = sshll.u32 %s377, 4
          %s382 = int_to_ptr.hbm [resolvable:$true] %s381
          %384 = dma.vmem_to_hbm [thread:$0]  %s380, 32, %s382, %s348
        $region48: #{tpu_custom_call.1} parent=31 // pred_fallthru
          _
      $region32: #{tpu_custom_call.1} parent=5 // pred_fallthru
        _
      %p385 = scmp.le.s32.totalorder 2, %s17
      // Predicated region
      $region49: #{tpu_custom_call.1} parent=5 // pred_check
        %p386 = pneg %p385
      $region50: #{tpu_custom_call.1} parent=5 // pred_check_branch
        %388 = sbr.rel (%p386) target = $region52
      $region51: #{tpu_custom_call.1} parent=5 // pred_region
        %s389 = ssub.s32 %s17, 2
        // Predicated region
        $region53: #{tpu_custom_call.1} parent=51 // pred_check
          %p390 = pneg %p130
        $region54: #{tpu_custom_call.1} parent=51 // pred_check_branch
          %392 = sbr.rel (%p390) target = $region56
        $region55: #{tpu_custom_call.1} parent=51 // pred_region
          %s393 = sand.u32 %s115, 1
          %s394 = scalar_lea.sflag [#allocation3], %s393
          %s395 = sand.u32 %s115, 1
          %s396 = smul.addr %s395, 8
          %s397 = scalar_lea.vmem [#allocation2], %s396
          %399 = dma.done %s394, 128
        $region56: #{tpu_custom_call.1} parent=51 // pred_fallthru
          _
        // Predicated region
        $region57: #{tpu_custom_call.1} parent=51 // pred_check
          %p400 = pneg %p156
        $region58: #{tpu_custom_call.1} parent=51 // pred_check_branch
          %402 = sbr.rel (%p400) target = $region60
        $region59: #{tpu_custom_call.1} parent=51 // pred_region
          %s403 = sand.u32 %s141, 1
          %s404 = scalar_lea.sflag [#allocation5], %s403
          %s405 = sand.u32 %s141, 1
          %s406 = smul.addr %s405, 2
          %s407 = scalar_lea.vmem [#allocation4], %s406
          %409 = dma.done %s404, 32
        $region60: #{tpu_custom_call.1} parent=51 // pred_fallthru
          _
      $region52: #{tpu_custom_call.1} parent=5 // pred_fallthru
        _
    $region6: #{tpu_custom_call.1} parent=1 // loop_footer
      %s21 = sadd.s32 1, %s17
    $region7: #{tpu_custom_call.1} parent=1 // loop_footer_branch
      %16 = sbr.rel target = $region3
    $region8: #{tpu_custom_call.1} parent=1 // loop_exit
      _
    %410 = vsyncpa [#allocation3], 1
    %s411 = scalar_lea.sflag [#allocation3], 1
    %412 = vsyncpa %s411, 1
    %413 = vsyncpa [#allocation5], 1
    %s414 = scalar_lea.sflag [#allocation5], 1
    %415 = vsyncpa %s414, 1

</llo_original>
